<compile_context>
chip_gen: v7x
topology: tpu7x:2x2x1
jax: 0.10.0
libtpu: 0.0.40
codegen_flags: <defaults>
</compile_context>

<pallas_src>
import jax
import jax.numpy as jnp
from jax.experimental import pallas as pl
from jax.experimental.pallas import tpu as pltpu


# ---------------------------------------------------------------------------
# Kernels
# ---------------------------------------------------------------------------
def _linear_relu_small_kernel(x_ref, wb_ref, o_ref):
    """Grid-free tiny-batch kernel.

    x_ref:  (B, in_f)            whole array resident in VMEM
    wb_ref: (in_f + 1, out_f)    packed [W^T ; b] (one DMA instead of two)
    o_ref:  (B, out_f)
    """
    in_f = x_ref.shape[1]
    wb = wb_ref[...]
    w = wb[:in_f, :]          # (in_f, out_f)
    bias = wb[in_f:, :]       # (1, out_f) -> broadcasts over rows
    acc = jnp.dot(x_ref[...], w, preferred_element_type=jnp.float32)
    o_ref[...] = jnp.maximum(acc + bias, 0.0).astype(o_ref.dtype)


def _linear_relu_t_kernel(xt_ref, w_ref, b_ref, o_ref):
    """Lane-dense gridded kernel (transposed layout).

    xt_ref: (in_f, TB)   batch in the 128-lane dimension
    w_ref:  (out_f, in_f)  (PyTorch nn.Linear weight layout, VMEM-resident)
    b_ref:  (out_f, 1)     (VMEM-resident)
    o_ref:  (out_f, TB)    unmasked lane-dense store
    """
    acc = jnp.dot(w_ref[...], xt_ref[...],
                  preferred_element_type=jnp.float32)      # MXU streams N = TB
    o_ref[...] = jnp.maximum(acc + b_ref[...], 0.0).astype(o_ref.dtype)


# ---------------------------------------------------------------------------
# Wrapper
# ---------------------------------------------------------------------------
_SMALL_B = 4096     # below this: single grid-free call (all cost is launch latency)
_MAX_TB = 65536     # batch-tile (lane) width for the gridded, transposed path


def _round_up(n, m):
    return ((n + m - 1) // m) * m


def _linear_relu_t(xt, w, b2):
    """xt: (in_f, B), w: (out_f, in_f), b2: (out_f, 1) -> (out_f, B)."""
    in_f, B = xt.shape
    out_f = w.shape[0]

    # Largest lane-aligned tile that fits the VMEM budget above, shrunk so the
    # grid always has >= 2 steps (gives v7x's 2nd TensorCore work to do).
    tb = min(_MAX_TB, _round_up(pl.cdiv(B, 2), 128))
    grid = (pl.cdiv(B, tb),)

    return pl.pallas_call(
        _linear_relu_t_kernel,
        out_shape=jax.ShapeDtypeStruct((out_f, B), xt.dtype),
        grid=grid,
        in_specs=[
            pl.BlockSpec((in_f, tb), lambda i: (0, i)),      # streamed over batch
            pl.BlockSpec((out_f, in_f), lambda i: (0, 0)),   # resident across steps
            pl.BlockSpec((out_f, 1), lambda i: (0, 0)),      # resident across steps
        ],
        out_specs=pl.BlockSpec((out_f, tb), lambda i: (0, i)),
        compiler_params=pltpu.CompilerParams(
            dimension_semantics=("parallel",),       # shard batch tiles across TCs
            vmem_limit_bytes=32 * 1024 * 1024,       # explicit headroom (v5e default 16 MiB)
        ),
    )(xt, w, b2)


def linear_relu(x, w, b):
    """x: (B, in_f) f32; w: (out_f, in_f) f32 (PyTorch layout); b: (out_f,) f32."""
    B, in_f = x.shape
    out_f = w.shape[0]

    if B <= _SMALL_B:
        # Tiny/medium batch: one invocation, whole arrays in VMEM, no grid.
        # Pack W^T and b into one array -> 2 input DMAs instead of 3.
        wb = jnp.concatenate([w.T, b.reshape(1, out_f)], axis=0)  # (in_f+1, out_f)
        return pl.pallas_call(
            _linear_relu_small_kernel,
            out_shape=jax.ShapeDtypeStruct((B, out_f), x.dtype),
            in_specs=[
                pl.BlockSpec(memory_space=pltpu.MemorySpace.VMEM),
                pl.BlockSpec(memory_space=pltpu.MemorySpace.VMEM),
            ],
            out_specs=pl.BlockSpec(memory_space=pltpu.MemorySpace.VMEM),
        )(x, wb)

    # Large batch: lane-dense transposed layout.
    # TODO(synk): keep activations in (feature, batch) layout upstream so these
    # boundary transposes (pure layout plumbing) are not materialized.
    xt = x.T                                  # (in_f, B)
    yt = _linear_relu_t(xt, w, b.reshape(out_f, 1))
    return yt.T                               # (B, out_f)


def reference(x, w, b):
    return jnp.maximum(x @ w.T + b, 0.0)


# ---------------------------------------------------------------------------
# Self-test
# ---------------------------------------------------------------------------
if __name__ == "__main__":
    key = jax.random.PRNGKey(0)
    kx, kw, kb, kx2 = jax.random.split(key, 4)

    B, IN_F, OUT_F = 8, 10, 5

    # nn.Linear(10, 5) parameters in PyTorch layout: weight (out_f, in_f), bias (out_f,)
    bound = 1.0 / jnp.sqrt(jnp.float32(IN_F))
    w = jax.random.uniform(kw, (OUT_F, IN_F), jnp.float32, -bound, bound)
    b = jax.random.uniform(kb, (OUT_F,), jnp.float32, -bound, bound)

    # --- tiny-batch (grid-free) path: the shape implied by the module spec ---
    x = jax.random.normal(kx, (B, IN_F), jnp.float32)
    out = linear_relu(x, w, b)
    jax.block_until_ready(out)
    assert out.shape == (B, OUT_F)
    assert jnp.allclose(out, reference(x, w, b), atol=1e-5, rtol=1e-5)

    # --- gridded lane-dense path: 2 grid steps, exercises the transposed layout ---
    B2 = 2 * _MAX_TB
    x2 = jax.random.normal(kx2, (B2, IN_F), jnp.float32)
    out2 = linear_relu(x2, w, b)
    jax.block_until_ready(out2)
    assert out2.shape == (B2, OUT_F)
    assert jnp.allclose(out2, reference(x2, w, b), atol=1e-4, rtol=1e-4)

    print("KERNEL_OK")
</pallas_src>

<mosaic_0001>
module attributes {stable_mosaic.version = 11 : i64} {
  func.func @_linear_relu_small_kernel(%arg0: memref<8x10xf32, #tpu.memory_space<vmem>>, %arg1: memref<11x5xf32, #tpu.memory_space<vmem>>, %arg2: memref<8x5xf32, #tpu.memory_space<vmem>>) attributes {dimension_semantics = [], scalar_prefetch = 0 : i64, scratch_operands = 0 : i64, tpu.core_type = #tpu.core_type<tc>} {
    %c0 = arith.constant 0 : index
    %c0_0 = arith.constant 0 : index
    %0 = vector.load %arg1[%c0, %c0_0] : memref<11x5xf32, #tpu.memory_space<vmem>>, vector<11x5xf32>
    %1 = vector.extract_strided_slice %0 {offsets = [0, 0], sizes = [10, 5], strides = [1, 1]} : vector<11x5xf32> to vector<10x5xf32>
    %2 = vector.extract_strided_slice %0 {offsets = [10, 0], sizes = [1, 5], strides = [1, 1]} : vector<11x5xf32> to vector<1x5xf32>
    %c0_1 = arith.constant 0 : index
    %c0_2 = arith.constant 0 : index
    %3 = vector.load %arg0[%c0_1, %c0_2] : memref<8x10xf32, #tpu.memory_space<vmem>>, vector<8x10xf32>
    %cst = arith.constant dense<0.000000e+00> : vector<8x5xf32>
    %4 = tpu.matmul %3, %1, %cst {dimension_numbers = #tpu.dot_dimension_numbers<[1], [0], [0], [1], [0, 0, 1, 1], [], []>} : vector<8x10xf32>, vector<10x5xf32>, vector<8x5xf32> -> vector<8x5xf32>
    %5 = vector.broadcast %2 : vector<1x5xf32> to vector<8x5xf32>
    %6 = arith.addf %4, %5 : vector<8x5xf32>
    %cst_3 = arith.constant 0.000000e+00 : f32
    %7 = vector.broadcast %cst_3 : f32 to vector<8x5xf32>
    %8 = arith.maximumf %6, %7 : vector<8x5xf32>
    %c0_4 = arith.constant 0 : index
    %c0_5 = arith.constant 0 : index
    %9 = vector.load %arg2[%c0_4, %c0_5] : memref<8x5xf32, #tpu.memory_space<vmem>>, vector<8x5xf32>
    tpu.vector_store %arg2[%c0_4, %c0_5], %8 {strides = array<i32>} : memref<8x5xf32, #tpu.memory_space<vmem>>, vector<8x5xf32>,
    return
  }
}

</mosaic_0001>

<llo_original>
// kernel: tpu_custom_call.1
$region0: #{tpu_custom_call.1}
  #allocation0 [shape = 'u32[]', space=smem, size = 0x4, offset = 0x4, fixed_abs, tag = 'smem constant byte address 0x4 - core index']
  #allocation1 [shape = 'u32[144,128]{1,0:T(1,128)}', space=vmem, size = 0x12000, scoped, tag = 'internal scratch']
  %s0 = inlined_call_operand.vmem [shape: f32[8,10], index: 0, kind: input, shape index: {}]
  %s1 = inlined_call_operand.vmem [shape: f32[11,5], index: 1, kind: input, shape index: {}]
  %s2 = inlined_call_operand.hbm [shape: f32[8,5], index: 2, kind: output, shape index: {}]
  %s3 = sld [smem:[#allocation0]]
  $region18: #{tpu_custom_call.1} parent=0
    _
  %s5 = ssub.s32 1, %s3
  %s6 = scalar_select 0, %s5, %s3
  $region1: #{tpu_custom_call.1} parent=0
    #allocation2 [shape = 'u8[4096]{0}', space=vmem, size = 0x1000, scoped, tag = 'output window, operand 0, single buffered']
    #allocation3 [shape = 's32[1]{0}', space=sflag, size = 0x4, scoped, tag = 'scoped memory for tpu_custom_call.1']
    %7 = vsyncpa [#allocation3], 0
    // Predicated region
    $region2: #{tpu_custom_call.1} parent=1 // pred_check
      _
    $region3: #{tpu_custom_call.1} parent=1 // pred_check_branch
      %9 = sbr.rel (0) target = $region5
    $region4: #{tpu_custom_call.1} parent=1 // pred_region
      _
    $region5: #{tpu_custom_call.1} parent=1 // pred_fallthru
      _
    // Predicated region
    $region6: #{tpu_custom_call.1} parent=1 // pred_check
      _
    $region7: #{tpu_custom_call.1} parent=1 // pred_check_branch
      %11 = sbr.rel (0) target = $region9
    $region8: #{tpu_custom_call.1} parent=1 // pred_region
      _
    $region9: #{tpu_custom_call.1} parent=1 // pred_fallthru
      _
    %v12 = vld [vmem:[%s1] sm:$0xff]
    %v13 = vld [vmem:[%s1 + $0x8] sm:$0x7]
    %v14 = vld [vmem:[%s0] sm:$0xff]
    %v15 = vlaneseq
    %v16 = vshrl.u32 %v15, 7
    %v17 = vsub.s32 2, %v16
    %v18 = vrot.slane %v13, %v17
    %vm19 = vcmask 80896
    %v21 = vsel %vm19, %v14, 0
    %vm23 = vcmask 1041408
    %v25 = vsel %vm23, %v13, 0
    %27 = vmatprep.subr.mxu0 0.0
    %28 = vmatpush1.msra.mxu0 %v12
    %29 = vmatprep.subr.mxu0 0.0
    %30 = vmatpush1.msra.mxu0 %v25
    %31 = vmatprep.subr.mxu0 0.0
    %32 = vmatpush1.msra.mxu0 0.0
    %33 = vmatprep.subr.mxu0 0.0
    %34 = vmatpush1.msra.mxu0 0.0
    %35 = vmatprep.subr.mxu0 0.0
    %36 = vmatpush1.msra.mxu0 0.0
    %37 = vmatprep.subr.mxu0 0.0
    %38 = vmatpush1.msra.mxu0 0.0
    %39 = vmatprep.subr.mxu0 0.0
    %40 = vmatpush1.msra.mxu0 0.0
    %41 = vmatprep.subr.mxu0 0.0
    %42 = vmatpush1.msra.mxu0 0.0
    %43 = vmatprep.subr.mxu0 0.0
    %44 = vmatpush1.msra.mxu0 0.0
    %45 = vmatprep.subr.mxu0 0.0
    %46 = vmatpush1.msra.mxu0 0.0
    %47 = vmatprep.subr.mxu0 0.0
    %48 = vmatpush1.msra.mxu0 0.0
    %49 = vmatprep.subr.mxu0 0.0
    %50 = vmatpush1.msra.mxu0 0.0
    %51 = vmatprep.subr.mxu0 0.0
    %52 = vmatpush1.msra.mxu0 0.0
    %53 = vmatprep.subr.mxu0 0.0
    %54 = vmatpush1.msra.mxu0 0.0
    %55 = vmatprep.subr.mxu0 0.0
    %56 = vmatpush1.msra.mxu0 0.0
    %57 = vmatprep.subr.mxu0 0.0
    %58 = vmatpush1.msra.mxu0 0.0
    %59 = vmatprep.subr.mxu0 0.0
    %60 = vmatpush1.msra.mxu0 0.0
    %61 = vmatprep.subr.mxu0 0.0
    %62 = vmatpush1.msra.mxu0 0.0
    %63 = vmatprep.subr.mxu0 0.0
    %64 = vmatpush1.msra.mxu0 0.0
    %65 = vmatprep.subr.mxu0 0.0
    %66 = vmatpush1.msra.mxu0 0.0
    %67 = vmatprep.subr.mxu0 0.0
    %68 = vmatpush1.msra.mxu0 0.0
    %69 = vmatprep.subr.mxu0 0.0
    %70 = vmatpush1.msra.mxu0 0.0
    %71 = vmatprep.subr.mxu0 0.0
    %72 = vmatpush1.msra.mxu0 0.0
    %73 = vmatprep.subr.mxu0 0.0
    %74 = vmatpush1.msra.mxu0 0.0
    %75 = vmatprep.subr.mxu0 0.0
    %76 = vmatpush1.msra.mxu0 0.0
    %77 = vmatprep.subr.mxu0 0.0
    %78 = vmatpush1.msra.mxu0 0.0
    %79 = vmatprep.subr.mxu0 0.0
    %80 = vmatpush1.msra.mxu0 0.0
    %81 = vmatprep.subr.mxu0 0.0
    %82 = vmatpush1.msra.mxu0 0.0
    %83 = vmatprep.subr.mxu0 0.0
    %84 = vmatpush1.msra.mxu0 0.0
    %85 = vmatprep.subr.mxu0 0.0
    %86 = vmatpush1.msra.mxu0 0.0
    %87 = vmatprep.subr.mxu0 0.0
    %88 = vmatpush1.msra.mxu0 0.0
    %89 = vmatprep.subr.mxu0 0.0
    %90 = vmatpush1.msra.mxu0 0.0
    %91 = vmatprep.mubr.f32.mxu0 0.0
    %92 = vmatmul.mubr.f32.gmra.mrb[0].mxu0 %v21
    %v93 = vpop.f32.mrb[0].mxu0
    %v94 = vadd.f32 %v18, %v93
    %v95 = vpop.f32.mrb[0].mxu0
    %96 = vdwg.mxu0
    %v97 = vmax.f32 %v94, 0.0
    %vm98 = vcmask 39936
    %99 = vst.msk [vmem:[#allocation2] sm:$0xff] %vm98, %v97
    // Predicated region
    $region10: #{tpu_custom_call.1} parent=1 // pred_check
      _
    $region11: #{tpu_custom_call.1} parent=1 // pred_check_branch
      %101 = sbr.rel (0) target = $region13
    $region12: #{tpu_custom_call.1} parent=1 // pred_region
      %s103 = ssub.s32 128, 128
      %104 = vsyncadd [#allocation3], %s103
      %s106 = sshll.u32 [#allocation2], 4
      %s107 = int_to_ptr.vmem [resolvable:$true] %s106
      %109 = dma.vmem_to_hbm [thread:$0]  %s107, 128, %s2, [#allocation3]
    $region13: #{tpu_custom_call.1} parent=1 // pred_fallthru
      _
    // Predicated region
    $region14: #{tpu_custom_call.1} parent=1 // pred_check
      _
    $region15: #{tpu_custom_call.1} parent=1 // pred_check_branch
      %111 = sbr.rel (0) target = $region17
    $region16: #{tpu_custom_call.1} parent=1 // pred_region
      %112 = dma.done [#allocation3], 128
    $region17: #{tpu_custom_call.1} parent=1 // pred_fallthru
      _
    %113 = vsyncpa [#allocation3], 1

</llo_original>
